<compile_context>
chip_gen: v5e
topology: v5e:2x2
jax: 0.10.0
libtpu: 0.0.40
codegen_flags: <defaults>
</compile_context>

<pallas_src>
import functools
import math

import jax
import jax.numpy as jnp
from jax import lax
from jax.experimental import pallas as pl
from jax.experimental.pallas import tpu as pltpu


_LANE = 128
_TM_CAP = 512            # max batch rows per tile
_TN_CAP = 512            # keep N (n_outs) untiled up to here
_TK_CAP = 1024           # contraction tile cap when K must be tiled
_K_FULL_CAP = 2048       # keep K untiled (full-dim block, no alignment pad) up to here
_SINGLE_BLOCK_BYTES = 2 * 1024 * 1024    # gridless path only for truly tiny problems
_VMEM_CAP_BYTES = 48 * 1024 * 1024       # portable cap (v7x: 64 MiB/TC physical)


def _round_up(x: int, m: int) -> int:
    return (x + m - 1) // m * m


def _sublane_pack(dtype) -> int:
    # Rows pack along sublanes for sub-32-bit dtypes: 8 (f32), 16 (bf16), 32 (i8).
    return max(8, 32 // jnp.dtype(dtype).itemsize)


def _pick_tile(dim: int, cap: int, align: int):
    """Return (tile, padded_dim) for one axis.

    Full-dim blocks (no alignment requirement, zero pad) are used whenever the
    whole axis fits under `cap`.  Otherwise pick the multiple-of-`align` tile
    <= cap that minimizes padding (largest tile on ties): 128-aligned problem
    dims get divisor tiles and therefore no padded HBM copies at all.
    """
    if dim <= cap:
        return dim, dim
    aligned = _round_up(dim, align)
    best_t, best_p = align, None
    t = (cap // align) * align
    while t >= align:
        p = _round_up(aligned, t)
        if best_p is None or p < best_p or (p == best_p and t > best_t):
            best_t, best_p = t, p
        t -= align
    return best_t, best_p


def _pad_to(a, shape):
    if tuple(a.shape) == tuple(shape):
        return a
    return jnp.pad(a, [(0, t - s) for s, t in zip(a.shape, shape)])


# ---------------------------------------------------------------------------
# Kernels
# ---------------------------------------------------------------------------
def _linear_single_block_kernel(x_ref, w_ref, b_ref, o_ref):
    """Whole problem in VMEM: x (B,F), w (N,F) [PyTorch layout], b (1,N)."""
    acc = lax.dot_general(
        x_ref[...], w_ref[...],
        dimension_numbers=(((1,), (1,)), ((), ())),   # contract F with F
        preferred_element_type=jnp.float32)
    o_ref[...] = (acc + b_ref[...].astype(jnp.float32)).astype(o_ref.dtype)


def _linear_single_block_swapped_kernel(x_ref, w_ref, b_ref, o_ref):
    """Tiny-head layout: out = W @ X^T -> (N, B); B on lanes => dense stores."""
    acc = lax.dot_general(
        w_ref[...], x_ref[...],
        dimension_numbers=(((1,), (1,)), ((), ())),
        preferred_element_type=jnp.float32)
    o_ref[...] = (acc + b_ref[...].astype(jnp.float32)).astype(o_ref.dtype)


def _linear_tiled_direct_kernel(x_ref, w_ref, b_ref, o_ref):
    """Tiled path, single K step: no scratch accumulator needed."""
    acc = lax.dot_general(
        x_ref[...], w_ref[...],
        dimension_numbers=(((1,), (1,)), ((), ())),
        preferred_element_type=jnp.float32)
    o_ref[...] = (acc + b_ref[...].astype(jnp.float32)).astype(o_ref.dtype)


def _linear_tiled_kernel(x_ref, w_ref, b_ref, o_ref, acc_ref):
    """Tiled path with K reduction: x (tm,tk), w (tn,tk), b (1,tn), acc f32."""
    k = pl.program_id(2)

    @pl.when(k == 0)
    def _():
        acc_ref[...] = jnp.zeros_like(acc_ref)

    acc_ref[...] += lax.dot_general(
        x_ref[...], w_ref[...],
        dimension_numbers=(((1,), (1,)), ((), ())),
        preferred_element_type=jnp.float32)

    @pl.when(k == pl.num_programs(2) - 1)
    def _():
        o_ref[...] = (acc_ref[...] + b_ref[...].astype(jnp.float32)
                      ).astype(o_ref.dtype)


# ---------------------------------------------------------------------------
# Wrapper
# ---------------------------------------------------------------------------
def lr_classifier_forward(x, weight, bias, *, input_size: int, iscomplex: bool,
                          cast_to_bf16: bool = False, force_tiled: bool = False):
    """Pallas forward pass matching LR_classifier.forward.

    Args:
      x:      leading dim = batch; remaining elements flatten (row-major) to F
              (= 2*input_size if iscomplex else input_size).
      weight: (n_outs, F)  -- PyTorch nn.Linear layout (NOT transposed).
      bias:   (n_outs,)
    """
    feat = 2 * input_size if iscomplex else input_size
    B = x.shape[0]
    n_outs = weight.shape[0]

    if x.size != B * feat:
        raise ValueError(f"x elements per row ({x.size // max(B,1)}) do not match "
                         f"expected feature size {feat} (input_size={input_size}, "
                         f"iscomplex={iscomplex}).")
    if weight.shape != (n_outs, feat):
        raise ValueError(f"weight shape {weight.shape} != ({n_outs}, {feat})")

    out_dtype = jnp.result_type(x.dtype, weight.dtype)
    x_flat = x.reshape(B, feat)                       # row-major, same as torch.reshape
    if cast_to_bf16 and x_flat.dtype == jnp.float32 and weight.dtype == jnp.float32:
        x_flat = x_flat.astype(jnp.bfloat16)
        weight = weight.astype(jnp.bfloat16)

    x_item = jnp.dtype(x_flat.dtype).itemsize
    w_item = jnp.dtype(weight.dtype).itemsize
    b_item = jnp.dtype(bias.dtype).itemsize
    o_item = jnp.dtype(out_dtype).itemsize

    footprint = (x_flat.size * x_item + weight.size * w_item
                 + bias.size * b_item + B * n_outs * o_item)

    # ----- single-block path: no grid, no padding, no pipelining ------------
    if not force_tiled and footprint <= _SINGLE_BLOCK_BYTES:
        cost = pl.CostEstimate(flops=2 * B * feat * n_outs, transcendentals=0,
                               bytes_accessed=footprint)
        vmem_specs = [pl.BlockSpec(memory_space=pltpu.MemorySpace.VMEM)] * 3
        out_vmem = pl.BlockSpec(memory_space=pltpu.MemorySpace.VMEM)

        if n_outs < _LANE <= B:
            # Lane-dense output layout for the tiny-head case: (N, B) in-kernel.
            out_t = pl.pallas_call(
                _linear_single_block_swapped_kernel,
                out_shape=jax.ShapeDtypeStruct((n_outs, B), out_dtype),
                in_specs=vmem_specs, out_specs=out_vmem, cost_estimate=cost,
            )(x_flat, weight, bias.reshape(n_outs, 1))
            return out_t.T

        return pl.pallas_call(
            _linear_single_block_kernel,
            out_shape=jax.ShapeDtypeStruct((B, n_outs), out_dtype),
            in_specs=vmem_specs, out_specs=out_vmem, cost_estimate=cost,
        )(x_flat, weight, bias.reshape(1, n_outs))

    # ----- tiled path --------------------------------------------------------
    # Full-dim blocks where possible (no alignment/pad); divisor tiles otherwise.
    tm, Mp = _pick_tile(B, _TM_CAP, _sublane_pack(x_flat.dtype))
    tn, Np = _pick_tile(n_outs, _TN_CAP, _LANE)
    if feat <= _K_FULL_CAP:
        tk, Kp = feat, feat
    else:
        tk, Kp = _pick_tile(feat, _TK_CAP, _LANE)

    # Pad only true remainders (zero K-pad contributes nothing to the dot).
    x_p = _pad_to(x_flat, (Mp, Kp))
    w_p = _pad_to(weight, (Np, Kp))
    b_p = _pad_to(bias.reshape(1, n_outs), (1, Np))

    grid = (Mp // tm, Np // tn, Kp // tk)
    ksteps = grid[2]

    # Explicit VMEM budget from the actual tile footprint (double-buffered
    # inputs + output + accumulator), capped for v7x's 64 MiB per-core VMEM.
    acc_bytes = tm * tn * 4 if ksteps > 1 else 0
    vmem_need = (2 * tm * tk * x_item + 2 * tn * tk * w_item
                 + 2 * tn * b_item + 2 * tm * tn * o_item + acc_bytes)
    vmem_limit = min(_VMEM_CAP_BYTES,
                     max(int(vmem_need * 1.5) + (2 << 20), 8 << 20))

    cost = pl.CostEstimate(
        flops=2 * Mp * Kp * Np, transcendentals=0,
        bytes_accessed=(Mp * Kp * x_item * grid[1]     # X refetched per N-tile
                        + Np * Kp * w_item * grid[0]   # W refetched per M-tile
                        + Np * b_item * grid[0]
                        + Mp * Np * o_item))

    cparams = pltpu.CompilerParams(
        dimension_semantics=("parallel", "parallel", "arbitrary"),
        vmem_limit_bytes=vmem_limit)

    in_specs = [
        pl.BlockSpec((tm, tk), lambda i, j, k: (i, k)),
        pl.BlockSpec((tn, tk), lambda i, j, k: (j, k)),
        pl.BlockSpec((1, tn), lambda i, j, k: (0, j)),
    ]
    out_spec = pl.BlockSpec((tm, tn), lambda i, j, k: (i, j))

    if ksteps == 1:
        out_p = pl.pallas_call(
            _linear_tiled_direct_kernel,
            out_shape=jax.ShapeDtypeStruct((Mp, Np), out_dtype),
            grid=grid, in_specs=in_specs, out_specs=out_spec,
            compiler_params=cparams, cost_estimate=cost,
        )(x_p, w_p, b_p)
    else:
        out_p = pl.pallas_call(
            _linear_tiled_kernel,
            out_shape=jax.ShapeDtypeStruct((Mp, Np), out_dtype),
            grid=grid, in_specs=in_specs, out_specs=out_spec,
            scratch_shapes=[pltpu.VMEM((tm, tn), jnp.float32)],
            compiler_params=cparams, cost_estimate=cost,
        )(x_p, w_p, b_p)

    if (Mp, Np) != (B, n_outs):
        out_p = out_p[:B, :n_outs]
    return out_p


def init_lr_classifier_params(key, input_size: int, n_outs: int, iscomplex: bool,
                              dtype=jnp.float32):
    """Deterministic synthetic init mimicking nn.Linear's uniform fan-in init."""
    feat = 2 * input_size if iscomplex else input_size
    k_w, k_b = jax.random.split(key)
    bound = 1.0 / math.sqrt(feat)
    weight = jax.random.uniform(k_w, (n_outs, feat), dtype, -bound, bound)
    bias = jax.random.uniform(k_b, (n_outs,), dtype, -bound, bound)
    return weight, bias


if __name__ == "__main__":
    key = jax.random.PRNGKey(0)
    ks = jax.random.split(key, 8)

    # ---- 1) small complex demo (single-block path): batch=2, input_size=32 --
    input_size, n_outs, iscomplex, batch = 32, 8, True, 2
    x = jax.random.normal(ks[0], (batch, input_size, 2), jnp.float32)
    w, b = init_lr_classifier_params(ks[1], input_size, n_outs, iscomplex)
    fwd = jax.jit(functools.partial(lr_classifier_forward,
                                    input_size=input_size, iscomplex=iscomplex))
    y = jax.block_until_ready(fwd(x, w, b))
    y_ref = x.reshape(batch, 2 * input_size) @ w.T + b
    assert y.shape == (batch, n_outs)
    assert jnp.allclose(y, y_ref, atol=1e-4, rtol=1e-4)

    # ---- 2) lane-dense swapped single-block: tiny head, larger batch --------
    B2, in2, n2 = 256, 96, 8
    x2 = jax.random.normal(ks[2], (B2, in2), jnp.float32)
    w2, b2 = init_lr_classifier_params(ks[3], in2, n2, iscomplex=False)
    y2 = jax.block_until_ready(jax.jit(functools.partial(
        lr_classifier_forward, input_size=in2, iscomplex=False))(x2, w2, b2))
    y2_ref = x2 @ w2.T + b2
    assert y2.shape == (B2, n2)
    assert jnp.allclose(y2, y2_ref, atol=1e-3, rtol=1e-3)

    # ---- 3) tiled path with K accumulation (128-aligned dims: zero padding) -
    B3, in3, n3 = 512, 2560, 384
    x3 = jax.random.normal(ks[4], (B3, in3), jnp.float32)
    w3, b3 = init_lr_classifier_params(ks[5], in3, n3, iscomplex=False)
    y3 = jax.block_until_ready(jax.jit(functools.partial(
        lr_classifier_forward, input_size=in3, iscomplex=False))(x3, w3, b3))
    y3_ref = x3 @ w3.T + b3
    assert y3.shape == (B3, n3)
    assert jnp.allclose(y3, y3_ref, atol=5e-2, rtol=1e-2)

    # ---- 4) ragged tiled path (true K remainder pad, full-dim M/N blocks) ---
    B4, in4, n4 = 300, 2500, 200
    x4 = jax.random.normal(ks[6], (B4, in4), jnp.float32)
    w4, b4 = init_lr_classifier_params(ks[7], in4, n4, iscomplex=False)
    y4 = jax.block_until_ready(jax.jit(functools.partial(
        lr_classifier_forward, input_size=in4, iscomplex=False))(x4, w4, b4))
    y4_ref = x4 @ w4.T + b4
    assert y4.shape == (B4, n4)
    assert jnp.allclose(y4, y4_ref, atol=5e-2, rtol=1e-2)

    print("KERNEL_OK")
</pallas_src>

<mosaic_0001>
module attributes {stable_mosaic.version = 11 : i64} {
  func.func @_linear_single_block_kernel(%arg0: memref<2x64xf32, #tpu.memory_space<vmem>>, %arg1: memref<8x64xf32, #tpu.memory_space<vmem>>, %arg2: memref<1x8xf32, #tpu.memory_space<vmem>>, %arg3: memref<2x8xf32, #tpu.memory_space<vmem>>) attributes {dimension_semantics = [], scalar_prefetch = 0 : i64, scratch_operands = 0 : i64, tpu.core_type = #tpu.core_type<tc>} {
    %c0 = arith.constant 0 : index
    %c0_0 = arith.constant 0 : index
    %0 = vector.load %arg0[%c0, %c0_0] : memref<2x64xf32, #tpu.memory_space<vmem>>, vector<2x64xf32>
    %c0_1 = arith.constant 0 : index
    %c0_2 = arith.constant 0 : index
    %1 = vector.load %arg1[%c0_1, %c0_2] : memref<8x64xf32, #tpu.memory_space<vmem>>, vector<8x64xf32>
    %cst = arith.constant dense<0.000000e+00> : vector<2x8xf32>
    %2 = tpu.matmul %0, %1, %cst {dimension_numbers = #tpu.dot_dimension_numbers<[1], [1], [0], [0], [0, 0, 1, 0], [], []>} : vector<2x64xf32>, vector<8x64xf32>, vector<2x8xf32> -> vector<2x8xf32>
    %c0_3 = arith.constant 0 : index
    %c0_4 = arith.constant 0 : index
    %3 = vector.load %arg2[%c0_3, %c0_4] : memref<1x8xf32, #tpu.memory_space<vmem>>, vector<1x8xf32>
    %4 = vector.broadcast %3 : vector<1x8xf32> to vector<2x8xf32>
    %5 = arith.addf %2, %4 : vector<2x8xf32>
    %c0_5 = arith.constant 0 : index
    %c0_6 = arith.constant 0 : index
    %6 = vector.load %arg3[%c0_5, %c0_6] : memref<2x8xf32, #tpu.memory_space<vmem>>, vector<2x8xf32>
    tpu.vector_store %arg3[%c0_5, %c0_6], %5 {strides = array<i32>} : memref<2x8xf32, #tpu.memory_space<vmem>>, vector<2x8xf32>,
    return
  }
}

</mosaic_0001>

<llo_original>
// kernel: lr_classifier_forward.1
$region0: #{lr_classifier_forward.1}
  #allocation0 [shape = 'u32[]', space=smem, size = 0x4, offset = 0x4, fixed_abs, tag = 'smem constant byte address 0x4 - core index']
  #allocation1 [shape = 'u32[72,128]{1,0:T(1,128)}', space=vmem, size = 0x9000, scoped, tag = 'internal scratch']
  %s0 = inlined_call_operand.vmem [shape: f32[2,64], index: 0, kind: input, shape index: {}]
  %s1 = inlined_call_operand.vmem [shape: f32[8,64], index: 1, kind: input, shape index: {}]
  %s2 = inlined_call_operand.vmem [shape: f32[1,8], index: 2, kind: input, shape index: {}]
  %s3 = inlined_call_operand.hbm [shape: f32[2,8], index: 3, kind: output, shape index: {}]
  %s4 = sld [smem:[#allocation0]]
  $region22: #{lr_classifier_forward.1} parent=0
    _
  %s6 = ssub.s32 1, %s4
  %s7 = scalar_select 0, %s6, %s4
  $region1: #{lr_classifier_forward.1} parent=0
    #allocation2 [shape = 'u8[1024]{0}', space=vmem, size = 0x400, scoped, tag = 'output window, operand 0, single buffered']
    #allocation3 [shape = 's32[1]{0}', space=sflag, size = 0x4, scoped, tag = 'scoped memory for lr_classifier_forward.1']
    %8 = vsyncpa [#allocation3], 0
    // Predicated region
    $region2: #{lr_classifier_forward.1} parent=1 // pred_check
      _
    $region3: #{lr_classifier_forward.1} parent=1 // pred_check_branch
      %10 = sbr.rel (0) target = $region5
    $region4: #{lr_classifier_forward.1} parent=1 // pred_region
      _
    $region5: #{lr_classifier_forward.1} parent=1 // pred_fallthru
      _
    // Predicated region
    $region6: #{lr_classifier_forward.1} parent=1 // pred_check
      _
    $region7: #{lr_classifier_forward.1} parent=1 // pred_check_branch
      %12 = sbr.rel (0) target = $region9
    $region8: #{lr_classifier_forward.1} parent=1 // pred_region
      _
    $region9: #{lr_classifier_forward.1} parent=1 // pred_fallthru
      _
    // Predicated region
    $region10: #{lr_classifier_forward.1} parent=1 // pred_check
      _
    $region11: #{lr_classifier_forward.1} parent=1 // pred_check_branch
      %14 = sbr.rel (0) target = $region13
    $region12: #{lr_classifier_forward.1} parent=1 // pred_region
      _
    $region13: #{lr_classifier_forward.1} parent=1 // pred_fallthru
      _
    %v15 = vld [vmem:[%s0] sm:$0x3]
    %v16 = vld [vmem:[%s1] sm:$0xff]
    %v17 = vld [vmem:[%s2] sm:$0x1]
    %v19 = vperm.slane %v17, 0
    %vm21 = vcmask 523264
    %v23 = vsel %vm21, %v15, 0
    %v26 = vsel %vm21, %v16, 0
    %28 = vmatpush.xpose.msra.mxu0 0.0
    %29 = vmatpush.xpose.msra.mxu0 0.0
    %30 = vmatpush.xpose.msra.mxu0 0.0
    %31 = vmatpush.xpose.msra.mxu0 0.0
    %32 = vmatpush.xpose.msra.mxu0 0.0
    %33 = vmatpush.xpose.msra.mxu0 0.0
    %34 = vmatpush.xpose.msra.mxu0 0.0
    %35 = vmatpush.xpose.msra.mxu0 0.0
    %36 = vmatpush.xpose.msra.mxu0 0.0
    %37 = vmatpush.xpose.msra.mxu0 0.0
    %38 = vmatpush.xpose.msra.mxu0 0.0
    %39 = vmatpush.xpose.msra.mxu0 0.0
    %40 = vmatpush.xpose.msra.mxu0 0.0
    %41 = vmatpush.xpose.msra.mxu0 0.0
    %42 = vmatpush.xpose.msra.mxu0 0.0
    %43 = vmatpush.xpose.msra.mxu0 %v26
    %44 = vmatmul.f32.gmra.mxu0 %v23
    %v45 = vpop.f32.mrf.mxu0
    %v46 = vadd.f32 %v19, %v45
    %47 = vdwg.mxu0
    %vm48 = vcmask 58368
    %49 = vst.msk [vmem:[#allocation2] sm:$0x3] %vm48, %v46
    // Predicated region
    $region14: #{lr_classifier_forward.1} parent=1 // pred_check
      _
    $region15: #{lr_classifier_forward.1} parent=1 // pred_check_branch
      %51 = sbr.rel (0) target = $region17
    $region16: #{lr_classifier_forward.1} parent=1 // pred_region
      %53 = vsyncadd [#allocation3], 0
      %s55 = sshll.u32 [#allocation2], 4
      %s56 = int_to_ptr.vmem [resolvable:$true] %s55
      %s57 = sshll.u32 %s3, 4
      %s58 = int_to_ptr.hbm [resolvable:$true] %s57
      %60 = dma.vmem_to_hbm [thread:$0]  %s56, 32, %s58, [#allocation3]
    $region17: #{lr_classifier_forward.1} parent=1 // pred_fallthru
      _
    // Predicated region
    $region18: #{lr_classifier_forward.1} parent=1 // pred_check
      _
    $region19: #{lr_classifier_forward.1} parent=1 // pred_check_branch
      %62 = sbr.rel (0) target = $region21
    $region20: #{lr_classifier_forward.1} parent=1 // pred_region
      %64 = dma.done [#allocation3], 32
    $region21: #{lr_classifier_forward.1} parent=1 // pred_fallthru
      _
    %65 = vsyncpa [#allocation3], 1

</llo_original>
